<compile_context>
chip_gen: v6e
topology: v6e:2x2x1
jax: 0.10.0
libtpu: 0.0.40
codegen_flags: <defaults>
</compile_context>

<pallas_src>
import functools

import jax
import jax.numpy as jnp
from jax.experimental import pallas as pl
from jax.experimental.pallas import tpu as pltpu


IN_FEATURES = 28 * 28          # 784; read unpadded (784 == full array last dim)
OUT_FEATURES = 10
N_PAD = 128                    # output lanes padded to a full vreg lane width
SUBLANE_ALIGN = 16             # bf16 output tile => 16-row sublane packing


def _round_up(x, m):
    return ((x + m - 1) // m) * m


def _backbone_kernel(x_ref, w1_ref, b1_ref, w2_ref, b2_ref, out_ref):
    # x_ref : (TB, 784)       f32   (cast to bf16 here on the VPU, under the DMA)
    # w1_ref: (784, H_pad)    bf16     b1_ref: (1, H_pad) f32
    # w2_ref: (H_pad, N_PAD)  bf16     b2_ref: (1, N_PAD) f32
    # out_ref: (TB, N_PAD)    bf16  (lane-dense, halves write-back bytes)
    x = x_ref[...].astype(jnp.bfloat16)
    h = jnp.dot(x, w1_ref[...], preferred_element_type=jnp.float32)
    h = jnp.maximum(h + b1_ref[...], 0.0)                       # bias + ReLU in f32
    y = jnp.dot(h.astype(jnp.bfloat16), w2_ref[...],
                preferred_element_type=jnp.float32)
    y = jnp.maximum(y + b2_ref[...], 0.0)                       # final ReLU (per spec)
    out_ref[...] = y.astype(out_ref.dtype)


def prepare_params(w1, b1, w2, b2):
    """One-time parameter prep (call once at init, NOT per forward):
    transpose to (in, out), pad output dims to lane-dense widths, cast weights
    to bf16.  The contraction dim (784) is NOT padded."""
    H = w1.shape[0]
    H_pad = _round_up(H, 128)
    w1_t = jnp.zeros((IN_FEATURES, H_pad), jnp.float32).at[:, :H].set(w1.T)
    b1_p = jnp.zeros((1, H_pad), jnp.float32).at[0, :H].set(b1)
    w2_t = jnp.zeros((H_pad, N_PAD), jnp.float32).at[:H, :OUT_FEATURES].set(w2.T)
    b2_p = jnp.zeros((1, N_PAD), jnp.float32).at[0, :OUT_FEATURES].set(b2)
    return (w1_t.astype(jnp.bfloat16), b1_p,
            w2_t.astype(jnp.bfloat16), b2_p)


@functools.partial(jax.jit, static_argnames=("batch_tile",))
def backbone_forward(x_nchw, w1_t, b1_p, w2_t, b2_p, *, batch_tile=1024):
    """x_nchw: (B, 1, 28, 28) f32. Prepared params from prepare_params()."""
    B = x_nchw.shape[0]
    H_pad = w1_t.shape[1]

    # Flatten like torch .view(B, -1).  No feature-dim pad, no bf16 cast here —
    # both would be extra full-HBM passes over x before the kernel reads it.
    x_flat = x_nchw.reshape(B, -1).astype(jnp.float32)

    # Batch tiling: large tiles amortize the ~0.35 us/grid-step overhead;
    # when the batch is big enough, cap the tile so the grid has >= 2 steps
    # (lets v7x shard the "parallel" batch axis across both TensorCores).
    B_aligned = _round_up(B, SUBLANE_ALIGN)
    TB = min(batch_tile, B_aligned)
    if B_aligned >= 2 * SUBLANE_ALIGN and TB == B_aligned:
        TB = _round_up((B_aligned + 1) // 2, SUBLANE_ALIGN)
    B_pad = _round_up(B_aligned, TB)
    if B_pad != B:
        x_flat = jnp.pad(x_flat, ((0, B_pad - B), (0, 0)))

    grid = (B_pad // TB,)

    out_padded = pl.pallas_call(
        _backbone_kernel,
        out_shape=jax.ShapeDtypeStruct((B_pad, N_PAD), jnp.bfloat16),
        grid_spec=pltpu.PrefetchScalarGridSpec(
            num_scalar_prefetch=0,
            grid=grid,
            in_specs=[
                # x tile: pipelined / double-buffered across batch tiles.
                pl.BlockSpec((TB, IN_FEATURES), lambda i: (i, 0)),
                # Weights/biases: constant index_map -> VMEM-resident across
                # all batch tiles.  (pipeline_mode=pl.Buffered(1) would
                # single-buffer them; only worth it for much larger H, skipped
                # here for portability — at H=128 the extra buffer is ~450 KB.)
                pl.BlockSpec((IN_FEATURES, H_pad), lambda i: (0, 0)),
                pl.BlockSpec((1, H_pad), lambda i: (0, 0)),
                pl.BlockSpec((H_pad, N_PAD), lambda i: (0, 0)),
                pl.BlockSpec((1, N_PAD), lambda i: (0, 0)),
            ],
            # Lane-dense (128-wide) bf16 output tile: unmasked vst, half the
            # write-back bytes of f32.
            out_specs=pl.BlockSpec((TB, N_PAD), lambda i: (i, 0)),
        ),
        compiler_params=pltpu.CompilerParams(
            dimension_semantics=("parallel",),
            # Default scoped-VMEM limits are fine at batch_tile <= 1024; set
            # vmem_limit_bytes if batch_tile is pushed to 2048+ (v5e's default
            # scoped limit is 16 MiB).
        ),
    )(x_flat, w1_t, b1_p, w2_t, b2_p)

    return out_padded[:B, :OUT_FEATURES].astype(jnp.float32)


def _init_linear(key, out_features, in_features):
    # Matches PyTorch nn.Linear default init: U(-1/sqrt(in), 1/sqrt(in))
    kw, kb = jax.random.split(key)
    bound = 1.0 / jnp.sqrt(jnp.float32(in_features))
    w = jax.random.uniform(kw, (out_features, in_features), jnp.float32, -bound, bound)
    b = jax.random.uniform(kb, (out_features,), jnp.float32, -bound, bound)
    return w, b


def _reference_f32(x_nchw, w1, b1, w2, b2):
    x = x_nchw.reshape(x_nchw.shape[0], -1)
    h = jnp.maximum(x @ w1.T + b1, 0.0)
    return jnp.maximum(h @ w2.T + b2, 0.0)


def _reference_mixed(x_nchw, w1, b1, w2, b2):
    # Emulates the kernel's precision: bf16 MXU inputs, f32 accumulation,
    # f32 bias + ReLU, bf16 output store.
    x = x_nchw.reshape(x_nchw.shape[0], -1).astype(jnp.bfloat16)
    h = jnp.dot(x, w1.T.astype(jnp.bfloat16),
                preferred_element_type=jnp.float32) + b1
    h = jnp.maximum(h, 0.0)
    y = jnp.dot(h.astype(jnp.bfloat16), w2.T.astype(jnp.bfloat16),
                preferred_element_type=jnp.float32) + b2
    y = jnp.maximum(y, 0.0)
    return y.astype(jnp.bfloat16).astype(jnp.float32)


if __name__ == "__main__":
    hidden_dim = 128
    B = 2

    key = jax.random.PRNGKey(0)
    k_x, k_l1, k_l2 = jax.random.split(key, 3)

    x = jax.random.normal(k_x, (B, 1, 28, 28), jnp.float32)   # NCHW like PyTorch
    w1, b1 = _init_linear(k_l1, hidden_dim, IN_FEATURES)
    w2, b2 = _init_linear(k_l2, OUT_FEATURES, hidden_dim)

    # One-time parameter prep (transpose / pad / bf16) — hoisted out of forward.
    params = prepare_params(w1, b1, w2, b2)

    out = backbone_forward(x, *params)
    out = jax.block_until_ready(out)

    assert out.shape == (B, OUT_FEATURES)

    # Tight check vs a reference using the kernel's exact mixed precision.
    ref_mixed = _reference_mixed(x, w1, b1, w2, b2)
    assert jnp.allclose(out, ref_mixed, atol=1e-2, rtol=1e-2), \
        "mismatch vs mixed-precision reference"

    # Loose check vs the full-f32 PyTorch-equivalent math.
    ref_f32 = _reference_f32(x, w1, b1, w2, b2)
    assert jnp.allclose(out, ref_f32, atol=5e-2, rtol=5e-2), \
        "mismatch vs f32 reference beyond bf16 tolerance"

    print("KERNEL_OK")
</pallas_src>

<mosaic_0001>
module attributes {stable_mosaic.version = 11 : i64} {
  func.func @_backbone_kernel(%arg0: i32, %arg1: memref<16x784xf32, #tpu.memory_space<vmem>>, %arg2: memref<784x128xbf16, #tpu.memory_space<vmem>>, %arg3: memref<1x128xf32, #tpu.memory_space<vmem>>, %arg4: memref<128x128xbf16, #tpu.memory_space<vmem>>, %arg5: memref<1x128xf32, #tpu.memory_space<vmem>>, %arg6: memref<16x128xbf16, #tpu.memory_space<vmem>>) attributes {dimension_semantics = [#tpu.dimension_semantics<parallel>], iteration_bounds = array<i64: 1>, scalar_prefetch = 0 : i64, scratch_operands = 0 : i64, tpu.core_type = #tpu.core_type<tc>, window_params = [{transform_indices = @transform_0, window_bounds = array<i64: 16, 784>}, {pipeline_mode = #tpu.pipeline_mode<synchronous>, transform_indices = @transform_1, window_bounds = array<i64: 784, 128>}, {pipeline_mode = #tpu.pipeline_mode<synchronous>, transform_indices = @transform_2, window_bounds = array<i64: 1, 128>}, {pipeline_mode = #tpu.pipeline_mode<synchronous>, transform_indices = @transform_3, window_bounds = array<i64: 128, 128>}, {pipeline_mode = #tpu.pipeline_mode<synchronous>, transform_indices = @transform_4, window_bounds = array<i64: 1, 128>}, {transform_indices = @transform_5, window_bounds = array<i64: 16, 128>}]} {
    %c0 = arith.constant 0 : index
    %c0_0 = arith.constant 0 : index
    %0 = vector.load %arg1[%c0, %c0_0] : memref<16x784xf32, #tpu.memory_space<vmem>>, vector<16x784xf32>
    %1 = arith.truncf %0 : vector<16x784xf32> to vector<16x784xbf16>
    %c0_1 = arith.constant 0 : index
    %c0_2 = arith.constant 0 : index
    %2 = vector.load %arg2[%c0_1, %c0_2] : memref<784x128xbf16, #tpu.memory_space<vmem>>, vector<784x128xbf16>
    %cst = arith.constant dense<0.000000e+00> : vector<16x128xf32>
    %3 = tpu.matmul %1, %2, %cst {dimension_numbers = #tpu.dot_dimension_numbers<[1], [0], [0], [1], [0, 0, 1, 1], [], []>} : vector<16x784xbf16>, vector<784x128xbf16>, vector<16x128xf32> -> vector<16x128xf32>
    %c0_3 = arith.constant 0 : index
    %c0_4 = arith.constant 0 : index
    %4 = vector.load %arg3[%c0_3, %c0_4] : memref<1x128xf32, #tpu.memory_space<vmem>>, vector<1x128xf32>
    %5 = vector.broadcast %4 : vector<1x128xf32> to vector<16x128xf32>
    %6 = arith.addf %3, %5 : vector<16x128xf32>
    %cst_5 = arith.constant 0.000000e+00 : f32
    %7 = vector.broadcast %cst_5 : f32 to vector<16x128xf32>
    %8 = arith.maximumf %6, %7 : vector<16x128xf32>
    %9 = arith.truncf %8 : vector<16x128xf32> to vector<16x128xbf16>
    %c0_6 = arith.constant 0 : index
    %c0_7 = arith.constant 0 : index
    %10 = vector.load %arg4[%c0_6, %c0_7] : memref<128x128xbf16, #tpu.memory_space<vmem>>, vector<128x128xbf16>
    %cst_8 = arith.constant dense<0.000000e+00> : vector<16x128xf32>
    %11 = tpu.matmul %9, %10, %cst_8 {dimension_numbers = #tpu.dot_dimension_numbers<[1], [0], [0], [1], [0, 0, 1, 1], [], []>} : vector<16x128xbf16>, vector<128x128xbf16>, vector<16x128xf32> -> vector<16x128xf32>
    %c0_9 = arith.constant 0 : index
    %c0_10 = arith.constant 0 : index
    %12 = vector.load %arg5[%c0_9, %c0_10] : memref<1x128xf32, #tpu.memory_space<vmem>>, vector<1x128xf32>
    %13 = vector.broadcast %12 : vector<1x128xf32> to vector<16x128xf32>
    %14 = arith.addf %11, %13 : vector<16x128xf32>
    %cst_11 = arith.constant 0.000000e+00 : f32
    %15 = vector.broadcast %cst_11 : f32 to vector<16x128xf32>
    %16 = arith.maximumf %14, %15 : vector<16x128xf32>
    %17 = arith.truncf %16 : vector<16x128xf32> to vector<16x128xbf16>
    %c0_12 = arith.constant 0 : index
    %c0_13 = arith.constant 0 : index
    %18 = vector.load %arg6[%c0_12, %c0_13] : memref<16x128xbf16, #tpu.memory_space<vmem>>, vector<16x128xbf16>
    tpu.vector_store %arg6[%c0_12, %c0_13], %17 {strides = array<i32>} : memref<16x128xbf16, #tpu.memory_space<vmem>>, vector<16x128xbf16>,
    return
  }
  func.func @transform_0(%arg0: i32) -> (i32, i32) {
    %c0_i32 = arith.constant 0 : i32
    %c0_i32_0 = arith.constant 0 : i32
    return %arg0, %c0_i32 : i32, i32
  }
  func.func @transform_1(%arg0: i32) -> (i32, i32) {
    %c0_i32 = arith.constant 0 : i32
    %c0_i32_0 = arith.constant 0 : i32
    %c0_i32_1 = arith.constant 0 : i32
    return %c0_i32, %c0_i32_0 : i32, i32
  }
  func.func @transform_2(%arg0: i32) -> (i32, i32) {
    %c0_i32 = arith.constant 0 : i32
    %c0_i32_0 = arith.constant 0 : i32
    %c0_i32_1 = arith.constant 0 : i32
    return %c0_i32, %c0_i32_0 : i32, i32
  }
  func.func @transform_3(%arg0: i32) -> (i32, i32) {
    %c0_i32 = arith.constant 0 : i32
    %c0_i32_0 = arith.constant 0 : i32
    %c0_i32_1 = arith.constant 0 : i32
    return %c0_i32, %c0_i32_0 : i32, i32
  }
  func.func @transform_4(%arg0: i32) -> (i32, i32) {
    %c0_i32 = arith.constant 0 : i32
    %c0_i32_0 = arith.constant 0 : i32
    %c0_i32_1 = arith.constant 0 : i32
    return %c0_i32, %c0_i32_0 : i32, i32
  }
  func.func @transform_5(%arg0: i32) -> (i32, i32) {
    %c0_i32 = arith.constant 0 : i32
    %c0_i32_0 = arith.constant 0 : i32
    return %arg0, %c0_i32 : i32, i32
  }
}

</mosaic_0001>

<llo_original>
// kernel: backbone_forward.1
$region0: #{backbone_forward.1}
  #allocation0 [shape = 'u32[]', space=smem, size = 0x4, offset = 0x4, fixed_abs, tag = 'smem constant byte address 0x4 - core index']
  #allocation1 [shape = 'u32[144,128]{1,0:T(1,128)}', space=vmem, size = 0x12000, scoped, tag = 'internal scratch']
  %s0 = inlined_call_operand.vmem [shape: f32[16,784], index: 0, kind: input, shape index: {}]
  %s1 = inlined_call_operand.hbm [shape: bf16[784,128], index: 1, kind: input, shape index: {}]
  %s2 = inlined_call_operand.vmem [shape: f32[1,128], index: 2, kind: input, shape index: {}]
  %s3 = inlined_call_operand.vmem [shape: bf16[128,128], index: 3, kind: input, shape index: {}]
  %s4 = inlined_call_operand.vmem [shape: f32[1,128], index: 4, kind: input, shape index: {}]
  %s5 = inlined_call_operand.vmem [shape: bf16[16,128], index: 5, kind: output, shape index: {}]
  %s6 = sld [smem:[#allocation0]]
  $region34: #{backbone_forward.1} parent=0
    _
  %s8 = ssub.s32 1, %s6
  %s9 = scalar_select 0, %s8, %s6
  $region1: #{backbone_forward.1} parent=0
    #allocation2 [shape = 'u8[200704]{0}', space=vmem, size = 0x31000, scoped, tag = 'input window, operand 1, single buffered']
    #allocation3 [shape = 's32[1]{0}', space=sflag, size = 0x4, scoped, tag = 'scoped memory for backbone_forward.1']
    %10 = vsyncpa [#allocation3], 0
    // Predicated region
    $region2: #{backbone_forward.1} parent=1 // pred_check
      _
    $region3: #{backbone_forward.1} parent=1 // pred_check_branch
      %12 = sbr.rel (0) target = $region5
    $region4: #{backbone_forward.1} parent=1 // pred_region
      _
    $region5: #{backbone_forward.1} parent=1 // pred_fallthru
      _
    // Predicated region
    $region6: #{backbone_forward.1} parent=1 // pred_check
      _
    $region7: #{backbone_forward.1} parent=1 // pred_check_branch
      %14 = sbr.rel (0) target = $region9
    $region8: #{backbone_forward.1} parent=1 // pred_region
      %s16 = ssub.s32 6272, 6272
      %17 = vsyncadd [#allocation3], %s16
      %s18 = sshll.u32 [#allocation2], 4
      %s19 = int_to_ptr.vmem [resolvable:$true] %s18
      %24 = dma.hbm_to_vmem [thread:$0]  %s1, 6272, %s19, [#allocation3], 64, 64, 4
    $region9: #{backbone_forward.1} parent=1 // pred_fallthru
      _
    // Predicated region
    $region10: #{backbone_forward.1} parent=1 // pred_check
      _
    $region11: #{backbone_forward.1} parent=1 // pred_check_branch
      %26 = sbr.rel (0) target = $region13
    $region12: #{backbone_forward.1} parent=1 // pred_region
      _
    $region13: #{backbone_forward.1} parent=1 // pred_fallthru
      _
    // Predicated region
    $region14: #{backbone_forward.1} parent=1 // pred_check
      _
    $region15: #{backbone_forward.1} parent=1 // pred_check_branch
      %28 = sbr.rel (0) target = $region17
    $region16: #{backbone_forward.1} parent=1 // pred_region
      _
    $region17: #{backbone_forward.1} parent=1 // pred_fallthru
      _
    // Predicated region
    $region18: #{backbone_forward.1} parent=1 // pred_check
      _
    $region19: #{backbone_forward.1} parent=1 // pred_check_branch
      %30 = sbr.rel (0) target = $region21
    $region20: #{backbone_forward.1} parent=1 // pred_region
      _
    $region21: #{backbone_forward.1} parent=1 // pred_fallthru
      _
    // Predicated region
    $region22: #{backbone_forward.1} parent=1 // pred_check
      _
    $region23: #{backbone_forward.1} parent=1 // pred_check_branch
      %32 = sbr.rel (0) target = $region25
    $region24: #{backbone_forward.1} parent=1 // pred_region
      %33 = dma.done [#allocation3], 6272
    $region25: #{backbone_forward.1} parent=1 // pred_fallthru
      _
    %v35 = vld [vmem:[%s0] sm:$0xff]
    %v36 = vld [vmem:[%s0 + $0x8] sm:$0xff]
    %v37 = vld [vmem:[%s0 + $0x10] sm:$0xff]
    %v38 = vld [vmem:[%s0 + $0x18] sm:$0xff]
    %v39 = vld [vmem:[%s0 + $0x20] sm:$0xff]
    %v40 = vld [vmem:[%s0 + $0x28] sm:$0xff]
    %v41 = vld [vmem:[%s0 + $0x30] sm:$0xff]
    %v42 = vld [vmem:[%s0 + $0x38] sm:$0xff]
    %v43 = vld [vmem:[%s0 + $0x40] sm:$0xff]
    %v44 = vld [vmem:[%s0 + $0x48] sm:$0xff]
    %v45 = vld [vmem:[%s0 + $0x50] sm:$0xff]
    %v46 = vld [vmem:[%s0 + $0x58] sm:$0xff]
    %v47 = vld [vmem:[%s0 + $0x60] sm:$0xff]
    %v48 = vld [vmem:[%s0 + $0x68] sm:$0xff]
    %v49 = vpack.c.bf16 %v42, %v35
    %v50 = vpack.c.bf16 %v43, %v36
    %v51 = vpack.c.bf16 %v44, %v37
    %v52 = vpack.c.bf16 %v45, %v38
    %v53 = vpack.c.bf16 %v46, %v39
    %v54 = vpack.c.bf16 %v47, %v40
    %v55 = vpack.c.bf16 %v48, %v41
    %v56 = vld [vmem:[#allocation2] sm:$0xf]
    %v57 = vld [vmem:[#allocation2 + $0x4] sm:$0xf]
    %v58 = vld [vmem:[#allocation2 + $0x8] sm:$0xf]
    %v59 = vld [vmem:[#allocation2 + $0xc] sm:$0xf]
    %v60 = vld [vmem:[#allocation2 + $0x10] sm:$0xf]
    %v61 = vld [vmem:[#allocation2 + $0x14] sm:$0xf]
    %v62 = vld [vmem:[#allocation2 + $0x18] sm:$0xf]
    %v63 = vld [vmem:[#allocation2 + $0x1c] sm:$0xf]
    %v64 = vld [vmem:[#allocation2 + $0x20] sm:$0xf]
    %v65 = vld [vmem:[#allocation2 + $0x24] sm:$0xf]
    %v66 = vld [vmem:[#allocation2 + $0x28] sm:$0xf]
    %v67 = vld [vmem:[#allocation2 + $0x2c] sm:$0xf]
    %v68 = vld [vmem:[#allocation2 + $0x30] sm:$0xf]
    %v69 = vld [vmem:[#allocation2 + $0x34] sm:$0xf]
    %v70 = vld [vmem:[#allocation2 + $0x38] sm:$0xf]
    %v71 = vld [vmem:[#allocation2 + $0x3c] sm:$0xf]
    %v72 = vld [vmem:[#allocation2 + $0x40] sm:$0xf]
    %v73 = vld [vmem:[#allocation2 + $0x44] sm:$0xf]
    %v74 = vld [vmem:[#allocation2 + $0x48] sm:$0xf]
    %v75 = vld [vmem:[#allocation2 + $0x4c] sm:$0xf]
    %v76 = vld [vmem:[#allocation2 + $0x50] sm:$0xf]
    %v77 = vld [vmem:[#allocation2 + $0x54] sm:$0xf]
    %v78 = vld [vmem:[#allocation2 + $0x58] sm:$0xf]
    %v79 = vld [vmem:[#allocation2 + $0x5c] sm:$0xf]
    %v80 = vld [vmem:[#allocation2 + $0x60] sm:$0xf]
    %v81 = vld [vmem:[#allocation2 + $0x64] sm:$0xf]
    %v82 = vld [vmem:[#allocation2 + $0x68] sm:$0xf]
    %v83 = vld [vmem:[#allocation2 + $0x6c] sm:$0xf]
    %v84 = vld [vmem:[#allocation2 + $0x70] sm:$0xf]
    %v85 = vld [vmem:[#allocation2 + $0x74] sm:$0xf]
    %v86 = vld [vmem:[#allocation2 + $0x78] sm:$0xf]
    %v87 = vld [vmem:[#allocation2 + $0x7c] sm:$0xf]
    %v88 = vld [vmem:[#allocation2 + $0x80] sm:$0xf]
    %v89 = vld [vmem:[#allocation2 + $0x84] sm:$0xf]
    %v90 = vld [vmem:[#allocation2 + $0x88] sm:$0xf]
    %v91 = vld [vmem:[#allocation2 + $0x8c] sm:$0xf]
    %v92 = vld [vmem:[#allocation2 + $0x90] sm:$0xf]
    %v93 = vld [vmem:[#allocation2 + $0x94] sm:$0xf]
    %v94 = vld [vmem:[#allocation2 + $0x98] sm:$0xf]
    %v95 = vld [vmem:[#allocation2 + $0x9c] sm:$0xf]
    %v96 = vld [vmem:[#allocation2 + $0xa0] sm:$0xf]
    %v97 = vld [vmem:[#allocation2 + $0xa4] sm:$0xf]
    %v98 = vld [vmem:[#allocation2 + $0xa8] sm:$0xf]
    %v99 = vld [vmem:[#allocation2 + $0xac] sm:$0xf]
    %v100 = vld [vmem:[#allocation2 + $0xb0] sm:$0xf]
    %v101 = vld [vmem:[#allocation2 + $0xb4] sm:$0xf]
    %v102 = vld [vmem:[#allocation2 + $0xb8] sm:$0xf]
    %v103 = vld [vmem:[#allocation2 + $0xbc] sm:$0xf]
    %v104 = vld [vmem:[#allocation2 + $0xc0] sm:$0xf]
    %v105 = vld [vmem:[#allocation2 + $0xc4] sm:$0xf]
    %v106 = vld [vmem:[#allocation2 + $0xc8] sm:$0xf]
    %v107 = vld [vmem:[#allocation2 + $0xcc] sm:$0xf]
    %v108 = vld [vmem:[#allocation2 + $0xd0] sm:$0xf]
    %v109 = vld [vmem:[#allocation2 + $0xd4] sm:$0xf]
    %v110 = vld [vmem:[#allocation2 + $0xd8] sm:$0xf]
    %v111 = vld [vmem:[#allocation2 + $0xdc] sm:$0xf]
    %v112 = vld [vmem:[#allocation2 + $0xe0] sm:$0xf]
    %v113 = vld [vmem:[#allocation2 + $0xe4] sm:$0xf]
    %v114 = vld [vmem:[#allocation2 + $0xe8] sm:$0xf]
    %v115 = vld [vmem:[#allocation2 + $0xec] sm:$0xf]
    %v116 = vld [vmem:[#allocation2 + $0xf0] sm:$0xf]
    %v117 = vld [vmem:[#allocation2 + $0xf4] sm:$0xf]
    %v118 = vld [vmem:[#allocation2 + $0xf8] sm:$0xf]
    %v119 = vld [vmem:[#allocation2 + $0xfc] sm:$0xf]
    %v120 = vld [vmem:[#allocation2 + $0x100] sm:$0xf]
    %v121 = vld [vmem:[#allocation2 + $0x104] sm:$0xf]
    %v122 = vld [vmem:[#allocation2 + $0x108] sm:$0xf]
    %v123 = vld [vmem:[#allocation2 + $0x10c] sm:$0xf]
    %v124 = vld [vmem:[#allocation2 + $0x110] sm:$0xf]
    %v125 = vld [vmem:[#allocation2 + $0x114] sm:$0xf]
    %v126 = vld [vmem:[#allocation2 + $0x118] sm:$0xf]
    %v127 = vld [vmem:[#allocation2 + $0x11c] sm:$0xf]
    %v128 = vld [vmem:[#allocation2 + $0x120] sm:$0xf]
    %v129 = vld [vmem:[#allocation2 + $0x124] sm:$0xf]
    %v130 = vld [vmem:[#allocation2 + $0x128] sm:$0xf]
    %v131 = vld [vmem:[#allocation2 + $0x12c] sm:$0xf]
    %v132 = vld [vmem:[#allocation2 + $0x130] sm:$0xf]
    %v133 = vld [vmem:[#allocation2 + $0x134] sm:$0xf]
    %v134 = vld [vmem:[#allocation2 + $0x138] sm:$0xf]
    %v135 = vld [vmem:[#allocation2 + $0x13c] sm:$0xf]
    %v136 = vld [vmem:[#allocation2 + $0x140] sm:$0xf]
    %v137 = vld [vmem:[#allocation2 + $0x144] sm:$0xf]
    %v138 = vld [vmem:[#allocation2 + $0x148] sm:$0xf]
    %v139 = vld [vmem:[#allocation2 + $0x14c] sm:$0xf]
    %v140 = vld [vmem:[#allocation2 + $0x150] sm:$0xf]
    %v141 = vld [vmem:[#allocation2 + $0x154] sm:$0xf]
    %v142 = vld [vmem:[#allocation2 + $0x158] sm:$0xf]
    %v143 = vld [vmem:[#allocation2 + $0x15c] sm:$0xf]
    %v144 = vld [vmem:[#allocation2 + $0x160] sm:$0xf]
    %v145 = vld [vmem:[#allocation2 + $0x164] sm:$0xf]
    %v146 = vld [vmem:[#allocation2 + $0x168] sm:$0xf]
    %v147 = vld [vmem:[#allocation2 + $0x16c] sm:$0xf]
    %v148 = vld [vmem:[#allocation2 + $0x170] sm:$0xf]
    %v149 = vld [vmem:[#allocation2 + $0x174] sm:$0xf]
    %v150 = vld [vmem:[#allocation2 + $0x178] sm:$0xf]
    %v151 = vld [vmem:[#allocation2 + $0x17c] sm:$0xf]
    %v152 = vld [vmem:[#allocation2 + $0x180] sm:$0xf]
    %v153 = vld [vmem:[#allocation2 + $0x184] sm:$0xf]
    %v154 = vld [vmem:[%s2] sm:$0x1]
    %v156 = vlaneseq
    %v157 = vshrl.u32 %v156, 7
    %v158 = vsub.s32 0, %v157
    %v159 = vrot.slane %v154, %v158
    %v259 = vunpack.c.l.b16 %v56
    %v260 = vunpack.c.l.b16 %v57
    %v261 = vunpack.c.l.b16 %v58
    %v262 = vunpack.c.l.b16 %v59
    %v263 = vunpack.c.l.b16 %v60
    %v264 = vunpack.c.l.b16 %v61
    %v265 = vunpack.c.l.b16 %v62
    %v266 = vunpack.c.l.b16 %v63
    %v267 = vunpack.c.l.b16 %v64
    %v268 = vunpack.c.l.b16 %v65
    %v269 = vunpack.c.l.b16 %v66
    %v270 = vunpack.c.l.b16 %v67
    %v271 = vunpack.c.l.b16 %v68
    %v272 = vunpack.c.l.b16 %v69
    %v273 = vunpack.c.l.b16 %v70
    %v274 = vunpack.c.l.b16 %v71
    %v275 = vunpack.c.l.b16 %v72
    %v276 = vunpack.c.l.b16 %v73
    %v277 = vunpack.c.l.b16 %v74
    %v278 = vunpack.c.l.b16 %v75
    %v279 = vunpack.c.l.b16 %v76
    %v280 = vunpack.c.l.b16 %v77
    %v281 = vunpack.c.l.b16 %v78
    %v282 = vunpack.c.l.b16 %v79
    %v283 = vunpack.c.l.b16 %v80
    %v284 = vunpack.c.l.b16 %v81
    %v285 = vunpack.c.l.b16 %v82
    %v286 = vunpack.c.l.b16 %v83
    %v287 = vunpack.c.l.b16 %v84
    %v288 = vunpack.c.l.b16 %v85
    %v289 = vunpack.c.l.b16 %v86
    %v290 = vunpack.c.l.b16 %v87
    %v291 = vunpack.c.l.b16 %v88
    %v292 = vunpack.c.l.b16 %v89
    %v293 = vunpack.c.l.b16 %v90
    %v294 = vunpack.c.l.b16 %v91
    %v295 = vunpack.c.l.b16 %v92
    %v296 = vunpack.c.l.b16 %v93
    %v297 = vunpack.c.l.b16 %v94
    %v298 = vunpack.c.l.b16 %v95
    %v299 = vunpack.c.l.b16 %v96
    %v300 = vunpack.c.l.b16 %v97
    %v301 = vunpack.c.l.b16 %v98
    %v302 = vunpack.c.l.b16 %v99
    %v303 = vunpack.c.l.b16 %v100
    %v304 = vunpack.c.l.b16 %v101
    %v305 = vunpack.c.l.b16 %v102
    %v306 = vunpack.c.l.b16 %v103
    %v307 = vunpack.c.l.b16 %v104
    %v308 = vunpack.c.l.b16 %v105
    %v309 = vunpack.c.l.b16 %v106
    %v310 = vunpack.c.l.b16 %v107
    %v311 = vunpack.c.l.b16 %v108
    %v312 = vunpack.c.l.b16 %v109
    %v313 = vunpack.c.l.b16 %v110
    %v314 = vunpack.c.l.b16 %v111
    %v315 = vunpack.c.l.b16 %v112
    %v316 = vunpack.c.l.b16 %v113
    %v317 = vunpack.c.l.b16 %v114
    %v318 = vunpack.c.l.b16 %v115
    %v319 = vunpack.c.l.b16 %v116
    %v320 = vunpack.c.l.b16 %v117
    %v321 = vunpack.c.l.b16 %v118
    %v322 = vunpack.c.l.b16 %v119
    %v323 = vunpack.c.l.b16 %v120
    %v324 = vunpack.c.l.b16 %v121
    %v325 = vunpack.c.l.b16 %v122
    %v326 = vunpack.c.l.b16 %v123
    %v327 = vunpack.c.l.b16 %v124
    %v328 = vunpack.c.l.b16 %v125
    %v329 = vunpack.c.l.b16 %v126
    %v330 = vunpack.c.l.b16 %v127
    %v331 = vunpack.c.l.b16 %v128
    %v332 = vunpack.c.l.b16 %v129
    %v333 = vunpack.c.l.b16 %v130
    %v334 = vunpack.c.l.b16 %v131
    %v335 = vunpack.c.l.b16 %v132
    %v336 = vunpack.c.l.b16 %v133
    %v337 = vunpack.c.l.b16 %v134
    %v338 = vunpack.c.l.b16 %v135
    %v339 = vunpack.c.l.b16 %v136
    %v340 = vunpack.c.l.b16 %v137
    %v341 = vunpack.c.l.b16 %v138
    %v342 = vunpack.c.l.b16 %v139
    %v343 = vunpack.c.l.b16 %v140
    %v344 = vunpack.c.l.b16 %v141
    %v345 = vunpack.c.l.b16 %v142
    %v346 = vunpack.c.l.b16 %v143
    %v347 = vunpack.c.l.b16 %v144
    %v348 = vunpack.c.l.b16 %v145
    %v349 = vunpack.c.l.b16 %v146
    %v350 = vunpack.c.l.b16 %v147
    %v351 = vunpack.c.l.b16 %v148
    %v352 = vunpack.c.l.b16 %v149
    %v353 = vunpack.c.l.b16 %v150
    %v354 = vunpack.c.l.b16 %v151
    %v355 = vunpack.c.l.b16 %v152
    %v356 = vunpack.c.l.b16 %v153
    %v357 = vpack.c.b16 %v260, %v259
    %v358 = vpack.c.b16 %v262, %v261
    %v359 = vpack.c.b16 %v264, %v263
    %v360 = vpack.c.b16 %v266, %v265
    %v361 = vpack.c.b16 %v268, %v267
    %v362 = vpack.c.b16 %v270, %v269
    %v363 = vpack.c.b16 %v272, %v271
    %v364 = vpack.c.b16 %v274, %v273
    %v365 = vpack.c.b16 %v276, %v275
    %v366 = vpack.c.b16 %v278, %v277
    %v367 = vpack.c.b16 %v280, %v279
    %v368 = vpack.c.b16 %v282, %v281
    %v369 = vpack.c.b16 %v284, %v283
    %v370 = vpack.c.b16 %v286, %v285
    %v371 = vpack.c.b16 %v288, %v287
    %v372 = vpack.c.b16 %v290, %v289
    %v373 = vpack.c.b16 %v292, %v291
    %v374 = vpack.c.b16 %v294, %v293
    %v375 = vpack.c.b16 %v296, %v295
    %v376 = vpack.c.b16 %v298, %v297
    %v377 = vpack.c.b16 %v300, %v299
    %v378 = vpack.c.b16 %v302, %v301
    %v379 = vpack.c.b16 %v304, %v303
    %v380 = vpack.c.b16 %v306, %v305
    %v381 = vpack.c.b16 %v308, %v307
    %v382 = vpack.c.b16 %v310, %v309
    %v383 = vpack.c.b16 %v312, %v311
    %v384 = vpack.c.b16 %v314, %v313
    %v385 = vpack.c.b16 %v316, %v315
    %v386 = vpack.c.b16 %v318, %v317
    %v387 = vpack.c.b16 %v320, %v319
    %v388 = vpack.c.b16 %v322, %v321
    %v389 = vpack.c.b16 %v324, %v323
    %v390 = vpack.c.b16 %v326, %v325
    %v391 = vpack.c.b16 %v328, %v327
    %v392 = vpack.c.b16 %v330, %v329
    %v393 = vpack.c.b16 %v332, %v331
    %v394 = vpack.c.b16 %v334, %v333
    %v395 = vpack.c.b16 %v336, %v335
    %v396 = vpack.c.b16 %v338, %v337
    %v397 = vpack.c.b16 %v340, %v339
    %v398 = vpack.c.b16 %v342, %v341
    %v399 = vpack.c.b16 %v344, %v343
    %v400 = vpack.c.b16 %v346, %v345
    %v401 = vpack.c.b16 %v348, %v347
    %v402 = vpack.c.b16 %v350, %v349
    %v403 = vpack.c.b16 %v352, %v351
    %v404 = vpack.c.b16 %v354, %v353
    %v405 = vpack.c.b16 %v356, %v355
    %vm455 = vcmask 130048
    %v457 = vsel %vm455, %v55, 0
    %459 = vmatprep.subr.bf16.mxu0 0
    %460 = vmatpush1.bf16.msra.mxu0 %v364
    %461 = vmatprep.subr.bf16.mxu0 0
    %462 = vmatpush1.bf16.msra.mxu0 %v363
    %463 = vmatprep.subr.bf16.mxu0 0
    %464 = vmatpush1.bf16.msra.mxu0 %v362
    %465 = vmatprep.subr.bf16.mxu0 0
    %466 = vmatpush1.bf16.msra.mxu0 %v361
    %467 = vmatprep.subr.bf16.mxu0 0
    %468 = vmatpush1.bf16.msra.mxu0 %v360
    %469 = vmatprep.subr.bf16.mxu0 0
    %470 = vmatpush1.bf16.msra.mxu0 %v359
    %471 = vmatprep.subr.bf16.mxu0 0
    %472 = vmatpush1.bf16.msra.mxu0 %v358
    %473 = vmatprep.subr.bf16.mxu0 0
    %474 = vmatpush1.bf16.msra.mxu0 %v357
    %475 = vmatprep.subr.bf16.mxu0 0
    %476 = vmatpush2.bf16.msra.mxu0 %v372
    %477 = vmatprep.subr.bf16.mxu0 0
    %478 = vmatpush2.bf16.msra.mxu0 %v371
    %479 = vmatprep.subr.bf16.mxu0 0
    %480 = vmatpush2.bf16.msra.mxu0 %v370
    %481 = vmatprep.subr.bf16.mxu0 0
    %482 = vmatpush2.bf16.msra.mxu0 %v369
    %483 = vmatprep.subr.bf16.mxu0 0
    %484 = vmatpush2.bf16.msra.mxu0 %v368
    %485 = vmatprep.subr.bf16.mxu0 0
    %486 = vmatpush2.bf16.msra.mxu0 %v367
    %487 = vmatprep.subr.bf16.mxu0 0
    %488 = vmatpush2.bf16.msra.mxu0 %v366
    %489 = vmatprep.subr.bf16.mxu0 0
    %490 = vmatpush2.bf16.msra.mxu0 %v365
    %491 = vmatprep.mubr.bf16.mxu0 %v50
    %492 = vmatmul.mubr.bf16.gmra.mxu0 %v49
    %v493 = vpop.f32.mrf.mxu0
    %v494 = vadd.f32 %v159, %v493
    %v495 = vpop.f32.mrf.mxu0
    %v496 = vpop.f32.mrf.mxu0
    %v497 = vadd.f32 %v159, %v496
    %v498 = vpop.f32.mrf.mxu0
    %499 = vdwg.mxu0
    %500 = vmatprep.subr.bf16.mxu0 0
    %501 = vmatpush1.bf16.msra.mxu0 %v380
    %502 = vmatprep.subr.bf16.mxu0 0
    %503 = vmatpush1.bf16.msra.mxu0 %v379
    %504 = vmatprep.subr.bf16.mxu0 0
    %505 = vmatpush1.bf16.msra.mxu0 %v378
    %506 = vmatprep.subr.bf16.mxu0 0
    %507 = vmatpush1.bf16.msra.mxu0 %v377
    %508 = vmatprep.subr.bf16.mxu0 0
    %509 = vmatpush1.bf16.msra.mxu0 %v376
    %510 = vmatprep.subr.bf16.mxu0 0
    %511 = vmatpush1.bf16.msra.mxu0 %v375
    %512 = vmatprep.subr.bf16.mxu0 0
    %513 = vmatpush1.bf16.msra.mxu0 %v374
    %514 = vmatprep.subr.bf16.mxu0 0
    %515 = vmatpush1.bf16.msra.mxu0 %v373
    %516 = vmatprep.subr.bf16.mxu0 0
    %517 = vmatpush2.bf16.msra.mxu0 %v388
    %518 = vmatprep.subr.bf16.mxu0 0
    %519 = vmatpush2.bf16.msra.mxu0 %v387
    %520 = vmatprep.subr.bf16.mxu0 0
    %521 = vmatpush2.bf16.msra.mxu0 %v386
    %522 = vmatprep.subr.bf16.mxu0 0
    %523 = vmatpush2.bf16.msra.mxu0 %v385
    %524 = vmatprep.subr.bf16.mxu0 0
    %525 = vmatpush2.bf16.msra.mxu0 %v384
    %526 = vmatprep.subr.bf16.mxu0 0
    %527 = vmatpush2.bf16.msra.mxu0 %v383
    %528 = vmatprep.subr.bf16.mxu0 0
    %529 = vmatpush2.bf16.msra.mxu0 %v382
    %530 = vmatprep.subr.bf16.mxu0 0
    %531 = vmatpush2.bf16.msra.mxu0 %v381
    %532 = vmatprep.mubr.bf16.mxu0 %v52
    %533 = vmatmul.mubr.bf16.gmra.mxu0 %v51
    %v534 = vpop.f32.mrf.mxu0
    %v535 = vadd.f32 %v494, %v534
    %v536 = vpop.f32.mrf.mxu0
    %v537 = vpop.f32.mrf.mxu0
    %v538 = vadd.f32 %v497, %v537
    %v539 = vpop.f32.mrf.mxu0
    %540 = vdwg.mxu0
    %541 = vmatprep.subr.bf16.mxu0 0
    %542 = vmatpush1.bf16.msra.mxu0 %v396
    %543 = vmatprep.subr.bf16.mxu0 0
    %544 = vmatpush1.bf16.msra.mxu0 %v395
    %545 = vmatprep.subr.bf16.mxu0 0
    %546 = vmatpush1.bf16.msra.mxu0 %v394
    %547 = vmatprep.subr.bf16.mxu0 0
    %548 = vmatpush1.bf16.msra.mxu0 %v393
    %549 = vmatprep.subr.bf16.mxu0 0
    %550 = vmatpush1.bf16.msra.mxu0 %v392
    %551 = vmatprep.subr.bf16.mxu0 0
    %552 = vmatpush1.bf16.msra.mxu0 %v391
    %553 = vmatprep.subr.bf16.mxu0 0
    %554 = vmatpush1.bf16.msra.mxu0 %v390
    %555 = vmatprep.subr.bf16.mxu0 0
    %556 = vmatpush1.bf16.msra.mxu0 %v389
    %557 = vmatprep.subr.bf16.mxu0 0
    %558 = vmatpush2.bf16.msra.mxu0 %v404
    %559 = vmatprep.subr.bf16.mxu0 0
    %560 = vmatpush2.bf16.msra.mxu0 %v403
    %561 = vmatprep.subr.bf16.mxu0 0
    %562 = vmatpush2.bf16.msra.mxu0 %v402
    %563 = vmatprep.subr.bf16.mxu0 0
    %564 = vmatpush2.bf16.msra.mxu0 %v401
    %565 = vmatprep.subr.bf16.mxu0 0
    %566 = vmatpush2.bf16.msra.mxu0 %v400
    %567 = vmatprep.subr.bf16.mxu0 0
    %568 = vmatpush2.bf16.msra.mxu0 %v399
    %569 = vmatprep.subr.bf16.mxu0 0
    %570 = vmatpush2.bf16.msra.mxu0 %v398
    %571 = vmatprep.subr.bf16.mxu0 0
    %572 = vmatpush2.bf16.msra.mxu0 %v397
    %573 = vmatprep.mubr.bf16.mxu0 %v54
    %574 = vmatmul.mubr.bf16.gmra.mxu0 %v53
    %v575 = vpop.f32.mrf.mxu0
    %v576 = vadd.f32 %v535, %v575
    %v577 = vpop.f32.mrf.mxu0
    %v578 = vpop.f32.mrf.mxu0
    %v579 = vadd.f32 %v538, %v578
    %v580 = vpop.f32.mrf.mxu0
    %581 = vdwg.mxu0
    %582 = vmatprep.subr.bf16.mxu0 0
    %583 = vmatpush1.bf16.msra.mxu0 0
    %584 = vmatprep.subr.bf16.mxu0 0
    %585 = vmatpush1.bf16.msra.mxu0 0
    %586 = vmatprep.subr.bf16.mxu0 0
    %587 = vmatpush1.bf16.msra.mxu0 0
    %588 = vmatprep.subr.bf16.mxu0 0
    %589 = vmatpush1.bf16.msra.mxu0 0
    %590 = vmatprep.subr.bf16.mxu0 0
    %591 = vmatpush1.bf16.msra.mxu0 0
    %592 = vmatprep.subr.bf16.mxu0 0
    %593 = vmatpush1.bf16.msra.mxu0 0
    %594 = vmatprep.subr.bf16.mxu0 0
    %595 = vmatpush1.bf16.msra.mxu0 0
    %596 = vmatprep.subr.bf16.mxu0 0
    %597 = vmatpush1.bf16.msra.mxu0 %v405
    %598 = vmatprep.subr.bf16.mxu0 0
    %599 = vmatpush2.bf16.msra.mxu0 0
    %600 = vmatprep.subr.bf16.mxu0 0
    %601 = vmatpush2.bf16.msra.mxu0 0
    %602 = vmatprep.subr.bf16.mxu0 0
    %603 = vmatpush2.bf16.msra.mxu0 0
    %604 = vmatprep.subr.bf16.mxu0 0
    %605 = vmatpush2.bf16.msra.mxu0 0
    %606 = vmatprep.subr.bf16.mxu0 0
    %607 = vmatpush2.bf16.msra.mxu0 0
    %608 = vmatprep.subr.bf16.mxu0 0
    %609 = vmatpush2.bf16.msra.mxu0 0
    %610 = vmatprep.subr.bf16.mxu0 0
    %611 = vmatpush2.bf16.msra.mxu0 0
    %612 = vmatprep.subr.bf16.mxu0 0
    %613 = vmatpush2.bf16.msra.mxu0 0
    %614 = vmatprep.mubr.bf16.mxu0 0
    %615 = vmatmul.mubr.bf16.gmra.mxu0 %v457
    %v616 = vpop.f32.mrf.mxu0
    %v617 = vadd.f32 %v576, %v616
    %v618 = vpop.f32.mrf.mxu0
    %v619 = vpop.f32.mrf.mxu0
    %v620 = vadd.f32 %v579, %v619
    %v621 = vpop.f32.mrf.mxu0
    %622 = vdwg.mxu0
    %v623 = vmax.f32 %v617, 0.0
    %v624 = vmax.f32 %v620, 0.0
    %v625 = vpack.c.bf16 %v624, %v623
    %v626 = vld [vmem:[%s3] sm:$0xf]
    %v627 = vld [vmem:[%s3 + $0x4] sm:$0xf]
    %v628 = vld [vmem:[%s3 + $0x8] sm:$0xf]
    %v629 = vld [vmem:[%s3 + $0xc] sm:$0xf]
    %v630 = vld [vmem:[%s3 + $0x10] sm:$0xf]
    %v631 = vld [vmem:[%s3 + $0x14] sm:$0xf]
    %v632 = vld [vmem:[%s3 + $0x18] sm:$0xf]
    %v633 = vld [vmem:[%s3 + $0x1c] sm:$0xf]
    %v634 = vld [vmem:[%s3 + $0x20] sm:$0xf]
    %v635 = vld [vmem:[%s3 + $0x24] sm:$0xf]
    %v636 = vld [vmem:[%s3 + $0x28] sm:$0xf]
    %v637 = vld [vmem:[%s3 + $0x2c] sm:$0xf]
    %v638 = vld [vmem:[%s3 + $0x30] sm:$0xf]
    %v639 = vld [vmem:[%s3 + $0x34] sm:$0xf]
    %v640 = vld [vmem:[%s3 + $0x38] sm:$0xf]
    %v641 = vld [vmem:[%s3 + $0x3c] sm:$0xf]
    %v642 = vld [vmem:[%s4] sm:$0x1]
    %v644 = vlaneseq
    %v645 = vshrl.u32 %v644, 7
    %v646 = vsub.s32 0, %v645
    %v647 = vrot.slane %v642, %v646
    %v665 = vunpack.c.l.b16 %v626
    %v666 = vunpack.c.l.b16 %v627
    %v667 = vunpack.c.l.b16 %v628
    %v668 = vunpack.c.l.b16 %v629
    %v669 = vunpack.c.l.b16 %v630
    %v670 = vunpack.c.l.b16 %v631
    %v671 = vunpack.c.l.b16 %v632
    %v672 = vunpack.c.l.b16 %v633
    %v673 = vunpack.c.l.b16 %v634
    %v674 = vunpack.c.l.b16 %v635
    %v675 = vunpack.c.l.b16 %v636
    %v676 = vunpack.c.l.b16 %v637
    %v677 = vunpack.c.l.b16 %v638
    %v678 = vunpack.c.l.b16 %v639
    %v679 = vunpack.c.l.b16 %v640
    %v680 = vunpack.c.l.b16 %v641
    %v681 = vpack.c.b16 %v666, %v665
    %v682 = vpack.c.b16 %v668, %v667
    %v683 = vpack.c.b16 %v670, %v669
    %v684 = vpack.c.b16 %v672, %v671
    %v685 = vpack.c.b16 %v674, %v673
    %v686 = vpack.c.b16 %v676, %v675
    %v687 = vpack.c.b16 %v678, %v677
    %v688 = vpack.c.b16 %v680, %v679
    %697 = vmatprep.subr.bf16.mxu0 0
    %698 = vmatpush1.bf16.msra.mxu0 %v688
    %699 = vmatprep.subr.bf16.mxu0 0
    %700 = vmatpush1.bf16.msra.mxu0 %v687
    %701 = vmatprep.subr.bf16.mxu0 0
    %702 = vmatpush1.bf16.msra.mxu0 %v686
    %703 = vmatprep.subr.bf16.mxu0 0
    %704 = vmatpush1.bf16.msra.mxu0 %v685
    %705 = vmatprep.subr.bf16.mxu0 0
    %706 = vmatpush1.bf16.msra.mxu0 %v684
    %707 = vmatprep.subr.bf16.mxu0 0
    %708 = vmatpush1.bf16.msra.mxu0 %v683
    %709 = vmatprep.subr.bf16.mxu0 0
    %710 = vmatpush1.bf16.msra.mxu0 %v682
    %711 = vmatprep.subr.bf16.mxu0 0
    %712 = vmatpush1.bf16.msra.mxu0 %v681
    %713 = vmatprep.subr.bf16.mxu0 0
    %714 = vmatpush2.bf16.msra.mxu0 0
    %715 = vmatprep.subr.bf16.mxu0 0
    %716 = vmatpush2.bf16.msra.mxu0 0
    %717 = vmatprep.subr.bf16.mxu0 0
    %718 = vmatpush2.bf16.msra.mxu0 0
    %719 = vmatprep.subr.bf16.mxu0 0
    %720 = vmatpush2.bf16.msra.mxu0 0
    %721 = vmatprep.subr.bf16.mxu0 0
    %722 = vmatpush2.bf16.msra.mxu0 0
    %723 = vmatprep.subr.bf16.mxu0 0
    %724 = vmatpush2.bf16.msra.mxu0 0
    %725 = vmatprep.subr.bf16.mxu0 0
    %726 = vmatpush2.bf16.msra.mxu0 0
    %727 = vmatprep.subr.bf16.mxu0 0
    %728 = vmatpush2.bf16.msra.mxu0 0
    %729 = vmatprep.mubr.bf16.mxu0 0
    %730 = vmatmul.mubr.bf16.gmra.mxu0 %v625
    %v731 = vpop.f32.mrf.mxu0
    %v732 = vadd.f32 %v647, %v731
    %v733 = vpop.f32.mrf.mxu0
    %v734 = vpop.f32.mrf.mxu0
    %v735 = vadd.f32 %v647, %v734
    %v736 = vpop.f32.mrf.mxu0
    %737 = vdwg.mxu0
    %v738 = vmax.f32 %v732, 0.0
    %v739 = vmax.f32 %v735, 0.0
    %v740 = vpack.c.bf16 %v739, %v738
    %v742 = vunpack.c.l.b16 %v740
    %v743 = vunpack.c.h.b16 %v740
    %v744 = vpack.c.b16 %v742, %v742
    %v745 = vpack.c.b16 %v743, %v743
    %748 = vst [vmem:[%s5] sm:$0xf] %v744
    %749 = vst [vmem:[%s5 + $0x4] sm:$0xf] %v745
    // Predicated region
    $region26: #{backbone_forward.1} parent=1 // pred_check
      _
    $region27: #{backbone_forward.1} parent=1 // pred_check_branch
      %751 = sbr.rel (0) target = $region29
    $region28: #{backbone_forward.1} parent=1 // pred_region
      _
    $region29: #{backbone_forward.1} parent=1 // pred_fallthru
      _
    // Predicated region
    $region30: #{backbone_forward.1} parent=1 // pred_check
      _
    $region31: #{backbone_forward.1} parent=1 // pred_check_branch
      %753 = sbr.rel (0) target = $region33
    $region32: #{backbone_forward.1} parent=1 // pred_region
      _
    $region33: #{backbone_forward.1} parent=1 // pred_fallthru
      _
    %754 = vsyncpa [#allocation3], 1

</llo_original>
